<compile_context>
chip_gen: v7x
topology: tpu7x:2x2x1
jax: 0.10.0
libtpu: 0.0.40
codegen_flags: <defaults>
</compile_context>

<pallas_src>
import functools

import numpy as np
import jax
import jax.numpy as jnp
from jax import lax
from jax.experimental import pallas as pl
from jax.experimental.pallas import tpu as pltpu


def _round_up(x, m):
    return (x + m - 1) // m * m


def _cdiv(a, b):
    return (a + b - 1) // b


def _reflect_index(idx, n):
    """ReflectionPad2d index map: padded-axis offset (may be <0 or >=n) -> source index."""
    idx = np.abs(idx)
    return np.where(idx >= n, 2 * (n - 1) - idx, idx)


def _conv_tanh_kernel(x_ref, w_ref, b_ref, o_ref, stage_ref, *, K, Wp, L_chunk, nchunks):
    """Row-block conv (folded taps) + bias + tanh(x/255)*150 + 127.5.

    x_ref:     (cin_p, Lp_in_blk)    bf16  flattened padded row block (+ zero tail)
    w_ref:     (cout_p, K*K*cin_p)   bf16  weights, tap-major / channel-minor
    b_ref:     (cout_p, 1)           f32   conv bias (broadcasts over lanes)
    o_ref:     (cout_p, L_blk_out)         L_blk_out = nchunks * L_chunk (lane dense)
    stage_ref: (K*K*cin_p, L_chunk)  bf16  VMEM scratch holding the K*K shifted slices
    """
    cin_p = x_ref.shape[0]
    w = w_ref[...]                 # hoisted once; reused by every chunk
    bias = b_ref[...]
    for c in range(nchunks):       # static unroll; nchunks is bounded by tile sizing
        base = c * L_chunk
        # Stage the K*K shifted tap slices as one tall operand -> the whole conv for
        # this chunk is a single MXU matmul with a K*K*cin_p-deep contraction.
        for t in range(K * K):
            off = (t // K) * Wp + (t % K)
            stage_ref[pl.ds(t * cin_p, cin_p), :] = x_ref[:, pl.ds(base + off, L_chunk)]
        y = jnp.dot(w, stage_ref[...], preferred_element_type=jnp.float32)
        y = jnp.tanh((y + bias) * (1.0 / 255.0)) * 150.0 + 127.5   # EUP tanh, f32 epilogue
        o_ref[:, pl.ds(base, L_chunk)] = y.astype(o_ref.dtype)


def conv_tanh(x_nchw, conv_w, conv_b, *, kernel_size, stride=1,
              out_dtype=jnp.float32, vmem_block_budget_bytes=24 * 1024 * 1024):
    """x_nchw: (B, Cin, H, W) f32. conv_w: (Cout, Cin, K, K). conv_b: (Cout,).

    Set out_dtype=jnp.bfloat16 to halve output HBM bytes when the consumer tolerates
    ~0.5 absolute error (e.g. a uint8 image quantizer); default keeps f32 semantics.
    """
    B, Cin, H, W = x_nchw.shape
    Cout = conv_w.shape[0]
    K = kernel_size
    pad = K // 2
    assert pad < H and pad < W, "reflection padding requires pad < spatial size"

    Hp, Wp = H + 2 * pad, W + 2 * pad
    Ho, Wo = Hp - K + 1, Wp - K + 1          # stride-1 conv output size

    cin_p = _round_up(Cin, 8)
    cout_p = _round_up(Cout, 8)
    out_bytes = jnp.dtype(out_dtype).itemsize

    # ---- tile sizing: bounded row blocks (+ halo) that fit the per-step VMEM budget ----
    max_lanes_per_block = 32 * 2048           # keeps the static chunk unroll <= 32
    per_row_bytes = 2 * Wp * (cin_p * 2 + cout_p * out_bytes)   # double-buffered in + out
    tr = min(Ho,
             max(1, vmem_block_budget_bytes // per_row_bytes),
             max(1, max_lanes_per_block // Wp))
    nb = _cdiv(Ho, tr)                        # number of row blocks
    rows_in = tr + K - 1                      # input rows per block incl. halo

    L_chunk = min(2048, _round_up(tr * Wp, 128))
    nchunks = _cdiv(tr * Wp, L_chunk)
    L_blk_out = nchunks * L_chunk                                  # lane dense (mult of 128)
    Lp_in_blk = _round_up(L_blk_out + (K - 1) * Wp + (K - 1), 128)  # covers taps + zero tail

    # ---- fused prologue: reflection pad + row-block halo + bf16 cast in one gather ----
    col_src = _reflect_index(np.arange(Wp) - pad, W)                          # (Wp,)
    padded_rows = np.arange(nb)[:, None] * tr + np.arange(rows_in)[None, :]   # (nb, rows_in)
    padded_rows = np.minimum(padded_rows, Hp - 1)     # clamp junk rows of the last block
    row_src = _reflect_index(padded_rows - pad, H)                            # (nb, rows_in)

    xb = x_nchw.astype(jnp.bfloat16)
    xb = jnp.take(xb, jnp.asarray(row_src.reshape(-1)), axis=2)   # (B, Cin, nb*rows_in, W)
    xb = xb.reshape(B, Cin, nb, rows_in, W)
    xb = jnp.take(xb, jnp.asarray(col_src), axis=4)               # (B, Cin, nb, rows_in, Wp)
    xb = jnp.transpose(xb, (0, 2, 1, 3, 4)).reshape(B, nb, Cin, rows_in * Wp)
    xb = jnp.pad(xb, ((0, 0), (0, 0), (0, cin_p - Cin), (0, Lp_in_blk - rows_in * Wp)))

    # Weights: (Cout, Cin, K, K) -> (cout_p, K*K*cin_p), tap-major / channel-minor.
    w = jnp.transpose(conv_w, (0, 2, 3, 1))                       # (Cout, K, K, Cin)
    w = jnp.pad(w, ((0, cout_p - Cout), (0, 0), (0, 0), (0, cin_p - Cin)))
    w = w.reshape(cout_p, K * K * cin_p).astype(jnp.bfloat16)
    b = jnp.pad(conv_b, (0, cout_p - Cout)).astype(jnp.float32).reshape(cout_p, 1)

    out_flat = pl.pallas_call(
        functools.partial(_conv_tanh_kernel, K=K, Wp=Wp, L_chunk=L_chunk, nchunks=nchunks),
        out_shape=jax.ShapeDtypeStruct((B, nb, cout_p, L_blk_out), out_dtype),
        grid_spec=pltpu.PrefetchScalarGridSpec(
            num_scalar_prefetch=0,
            grid=(B, nb),
            in_specs=[
                pl.BlockSpec((None, None, cin_p, Lp_in_blk), lambda bi, ri: (bi, ri, 0, 0)),
                pl.BlockSpec((cout_p, K * K * cin_p), lambda bi, ri: (0, 0)),
                pl.BlockSpec((cout_p, 1), lambda bi, ri: (0, 0)),
            ],
            out_specs=pl.BlockSpec((None, None, cout_p, L_blk_out),
                                   lambda bi, ri: (bi, ri, 0, 0)),
            scratch_shapes=[pltpu.VMEM((K * K * cin_p, L_chunk), jnp.bfloat16)],
        ),
        compiler_params=pltpu.CompilerParams(
            dimension_semantics=("parallel", "parallel"),   # batch AND row blocks shardable
            vmem_limit_bytes=64 * 1024 * 1024,
        ),
    )(xb, w, b)

    # ---- reassembly: slices before reshape so XLA fuses the crop into one copy ----
    out = lax.slice_in_dim(out_flat, 0, tr * Wp, axis=3)          # drop lane padding
    out = out.reshape(B, nb, cout_p, tr, Wp)
    out = lax.slice_in_dim(out, 0, Wo, axis=4)                    # drop junk columns
    out = jnp.transpose(out, (0, 2, 1, 3, 4)).reshape(B, cout_p, nb * tr, Wo)
    out = out[:, :Cout, :Ho, :]                                   # drop channel pad / junk rows
    if stride != 1:
        # TODO(synk): native strided path (stride the tap slices / output index_map)
        # instead of computing the stride-1 conv and subsampling here.
        out = out[:, :, ::stride, ::stride]
    return out.astype(jnp.float32)


def _reference(x_nchw, conv_w, conv_b, *, kernel_size, stride=1):
    pad = kernel_size // 2
    xp = jnp.pad(x_nchw, ((0, 0), (0, 0), (pad, pad), (pad, pad)), mode="reflect")
    y = lax.conv_general_dilated(xp, conv_w, (stride, stride), "VALID",
                                 dimension_numbers=("NCHW", "OIHW", "NCHW"))
    y = y + conv_b.reshape(1, -1, 1, 1)
    return jnp.tanh(y / 255.0) * 150.0 + 255.0 / 2.0


if __name__ == "__main__":
    # ConvTanh(in_channels=4, out_channels=8, kernel_size=3, stride=1)
    B, Cin, Cout, K, stride = 2, 4, 8, 3, 1
    H = W = 16

    key = jax.random.PRNGKey(0)
    k_x, k_w, k_b = jax.random.split(key, 3)
    x = jax.random.normal(k_x, (B, Cin, H, W), dtype=jnp.float32)
    conv_w = 0.5 * jax.random.normal(k_w, (Cout, Cin, K, K), dtype=jnp.float32)
    conv_b = 0.5 * jax.random.normal(k_b, (Cout,), dtype=jnp.float32)

    out = conv_tanh(x, conv_w, conv_b, kernel_size=K, stride=stride)
    out = jax.block_until_ready(out)

    ref = _reference(x, conv_w, conv_b, kernel_size=K, stride=stride)
    assert out.shape == (B, Cout, H, W), out.shape
    err = float(jnp.max(jnp.abs(out - ref)))
    # bf16 matmul inputs with f32 accumulation + f32 output: small absolute tolerance.
    assert err < 2e-1, err
    print("KERNEL_OK")
</pallas_src>

<mosaic_0001>
module attributes {stable_mosaic.version = 11 : i64} {
  func.func @_conv_tanh_kernel(%arg0: i32, %arg1: i32, %arg2: memref<1x1x8x512xbf16, #tpu.memory_space<vmem>>, %arg3: memref<8x72xbf16, #tpu.memory_space<vmem>>, %arg4: memref<8x1xf32, #tpu.memory_space<vmem>>, %arg5: memref<1x1x8x384xf32, #tpu.memory_space<vmem>>, %arg6: memref<72x384xbf16, #tpu.memory_space<vmem>>) attributes {dimension_semantics = [#tpu.dimension_semantics<parallel>, #tpu.dimension_semantics<parallel>], iteration_bounds = array<i64: 2, 1>, scalar_prefetch = 0 : i64, scratch_operands = 1 : i64, tpu.core_type = #tpu.core_type<tc>, window_params = [{transform_indices = @transform_0, window_bounds = array<i64: 1, 1, 8, 512>}, {pipeline_mode = #tpu.pipeline_mode<synchronous>, transform_indices = @transform_1, window_bounds = array<i64: 8, 72>}, {pipeline_mode = #tpu.pipeline_mode<synchronous>, transform_indices = @transform_2, window_bounds = array<i64: 8, 1>}, {transform_indices = @transform_3, window_bounds = array<i64: 1, 1, 8, 384>}]} {
    %c0 = arith.constant 0 : index
    %c0_0 = arith.constant 0 : index
    %0 = vector.load %arg3[%c0, %c0_0] : memref<8x72xbf16, #tpu.memory_space<vmem>>, vector<8x72xbf16>
    %c0_1 = arith.constant 0 : index
    %c0_2 = arith.constant 0 : index
    %1 = vector.load %arg4[%c0_1, %c0_2] : memref<8x1xf32, #tpu.memory_space<vmem>>, vector<8x1xf32>
    %c0_3 = arith.constant 0 : index
    %c0_4 = arith.constant 0 : index
    %c0_5 = arith.constant 0 : index
    %c0_6 = arith.constant 0 : index
    %2 = vector.load %arg2[%c0_3, %c0_4, %c0_5, %c0_6] : memref<1x1x8x512xbf16, #tpu.memory_space<vmem>>, vector<1x1x8x384xbf16>
    %3 = vector.shape_cast %2 : vector<1x1x8x384xbf16> to vector<8x384xbf16>
    %c0_7 = arith.constant 0 : index
    %c0_8 = arith.constant 0 : index
    %4 = vector.load %arg6[%c0_7, %c0_8] : memref<72x384xbf16, #tpu.memory_space<vmem>>, vector<8x384xbf16>
    tpu.vector_store %arg6[%c0_7, %c0_8], %3 {strides = array<i32>} : memref<72x384xbf16, #tpu.memory_space<vmem>>, vector<8x384xbf16>,
    %c0_9 = arith.constant 0 : index
    %c0_10 = arith.constant 0 : index
    %c0_11 = arith.constant 0 : index
    %c1 = arith.constant 1 : index
    %5 = vector.load %arg2[%c0_9, %c0_10, %c0_11, %c1] : memref<1x1x8x512xbf16, #tpu.memory_space<vmem>>, vector<1x1x8x384xbf16>
    %6 = vector.shape_cast %5 : vector<1x1x8x384xbf16> to vector<8x384xbf16>
    %c8 = arith.constant 8 : index
    %c0_12 = arith.constant 0 : index
    %7 = vector.load %arg6[%c8, %c0_12] : memref<72x384xbf16, #tpu.memory_space<vmem>>, vector<8x384xbf16>
    tpu.vector_store %arg6[%c8, %c0_12], %6 {strides = array<i32>} : memref<72x384xbf16, #tpu.memory_space<vmem>>, vector<8x384xbf16>,
    %c0_13 = arith.constant 0 : index
    %c0_14 = arith.constant 0 : index
    %c0_15 = arith.constant 0 : index
    %c2 = arith.constant 2 : index
    %8 = vector.load %arg2[%c0_13, %c0_14, %c0_15, %c2] : memref<1x1x8x512xbf16, #tpu.memory_space<vmem>>, vector<1x1x8x384xbf16>
    %9 = vector.shape_cast %8 : vector<1x1x8x384xbf16> to vector<8x384xbf16>
    %c16 = arith.constant 16 : index
    %c0_16 = arith.constant 0 : index
    %10 = vector.load %arg6[%c16, %c0_16] : memref<72x384xbf16, #tpu.memory_space<vmem>>, vector<8x384xbf16>
    tpu.vector_store %arg6[%c16, %c0_16], %9 {strides = array<i32>} : memref<72x384xbf16, #tpu.memory_space<vmem>>, vector<8x384xbf16>,
    %c0_17 = arith.constant 0 : index
    %c0_18 = arith.constant 0 : index
    %c0_19 = arith.constant 0 : index
    %c18 = arith.constant 18 : index
    %11 = vector.load %arg2[%c0_17, %c0_18, %c0_19, %c18] : memref<1x1x8x512xbf16, #tpu.memory_space<vmem>>, vector<1x1x8x384xbf16>
    %12 = vector.shape_cast %11 : vector<1x1x8x384xbf16> to vector<8x384xbf16>
    %c24 = arith.constant 24 : index
    %c0_20 = arith.constant 0 : index
    %13 = vector.load %arg6[%c24, %c0_20] : memref<72x384xbf16, #tpu.memory_space<vmem>>, vector<8x384xbf16>
    tpu.vector_store %arg6[%c24, %c0_20], %12 {strides = array<i32>} : memref<72x384xbf16, #tpu.memory_space<vmem>>, vector<8x384xbf16>,
    %c0_21 = arith.constant 0 : index
    %c0_22 = arith.constant 0 : index
    %c0_23 = arith.constant 0 : index
    %c19 = arith.constant 19 : index
    %14 = vector.load %arg2[%c0_21, %c0_22, %c0_23, %c19] : memref<1x1x8x512xbf16, #tpu.memory_space<vmem>>, vector<1x1x8x384xbf16>
    %15 = vector.shape_cast %14 : vector<1x1x8x384xbf16> to vector<8x384xbf16>
    %c32 = arith.constant 32 : index
    %c0_24 = arith.constant 0 : index
    %16 = vector.load %arg6[%c32, %c0_24] : memref<72x384xbf16, #tpu.memory_space<vmem>>, vector<8x384xbf16>
    tpu.vector_store %arg6[%c32, %c0_24], %15 {strides = array<i32>} : memref<72x384xbf16, #tpu.memory_space<vmem>>, vector<8x384xbf16>,
    %c0_25 = arith.constant 0 : index
    %c0_26 = arith.constant 0 : index
    %c0_27 = arith.constant 0 : index
    %c20 = arith.constant 20 : index
    %17 = vector.load %arg2[%c0_25, %c0_26, %c0_27, %c20] : memref<1x1x8x512xbf16, #tpu.memory_space<vmem>>, vector<1x1x8x384xbf16>
    %18 = vector.shape_cast %17 : vector<1x1x8x384xbf16> to vector<8x384xbf16>
    %c40 = arith.constant 40 : index
    %c0_28 = arith.constant 0 : index
    %19 = vector.load %arg6[%c40, %c0_28] : memref<72x384xbf16, #tpu.memory_space<vmem>>, vector<8x384xbf16>
    tpu.vector_store %arg6[%c40, %c0_28], %18 {strides = array<i32>} : memref<72x384xbf16, #tpu.memory_space<vmem>>, vector<8x384xbf16>,
    %c0_29 = arith.constant 0 : index
    %c0_30 = arith.constant 0 : index
    %c0_31 = arith.constant 0 : index
    %c36 = arith.constant 36 : index
    %20 = vector.load %arg2[%c0_29, %c0_30, %c0_31, %c36] : memref<1x1x8x512xbf16, #tpu.memory_space<vmem>>, vector<1x1x8x384xbf16>
    %21 = vector.shape_cast %20 : vector<1x1x8x384xbf16> to vector<8x384xbf16>
    %c48 = arith.constant 48 : index
    %c0_32 = arith.constant 0 : index
    %22 = vector.load %arg6[%c48, %c0_32] : memref<72x384xbf16, #tpu.memory_space<vmem>>, vector<8x384xbf16>
    tpu.vector_store %arg6[%c48, %c0_32], %21 {strides = array<i32>} : memref<72x384xbf16, #tpu.memory_space<vmem>>, vector<8x384xbf16>,
    %c0_33 = arith.constant 0 : index
    %c0_34 = arith.constant 0 : index
    %c0_35 = arith.constant 0 : index
    %c37 = arith.constant 37 : index
    %23 = vector.load %arg2[%c0_33, %c0_34, %c0_35, %c37] : memref<1x1x8x512xbf16, #tpu.memory_space<vmem>>, vector<1x1x8x384xbf16>
    %24 = vector.shape_cast %23 : vector<1x1x8x384xbf16> to vector<8x384xbf16>
    %c56 = arith.constant 56 : index
    %c0_36 = arith.constant 0 : index
    %25 = vector.load %arg6[%c56, %c0_36] : memref<72x384xbf16, #tpu.memory_space<vmem>>, vector<8x384xbf16>
    tpu.vector_store %arg6[%c56, %c0_36], %24 {strides = array<i32>} : memref<72x384xbf16, #tpu.memory_space<vmem>>, vector<8x384xbf16>,
    %c0_37 = arith.constant 0 : index
    %c0_38 = arith.constant 0 : index
    %c0_39 = arith.constant 0 : index
    %c38 = arith.constant 38 : index
    %26 = vector.load %arg2[%c0_37, %c0_38, %c0_39, %c38] : memref<1x1x8x512xbf16, #tpu.memory_space<vmem>>, vector<1x1x8x384xbf16>
    %27 = vector.shape_cast %26 : vector<1x1x8x384xbf16> to vector<8x384xbf16>
    %c64 = arith.constant 64 : index
    %c0_40 = arith.constant 0 : index
    %28 = vector.load %arg6[%c64, %c0_40] : memref<72x384xbf16, #tpu.memory_space<vmem>>, vector<8x384xbf16>
    tpu.vector_store %arg6[%c64, %c0_40], %27 {strides = array<i32>} : memref<72x384xbf16, #tpu.memory_space<vmem>>, vector<8x384xbf16>,
    %c0_41 = arith.constant 0 : index
    %c0_42 = arith.constant 0 : index
    %29 = vector.load %arg6[%c0_41, %c0_42] : memref<72x384xbf16, #tpu.memory_space<vmem>>, vector<72x384xbf16>
    %cst = arith.constant dense<0.000000e+00> : vector<8x384xf32>
    %30 = tpu.matmul %0, %29, %cst {dimension_numbers = #tpu.dot_dimension_numbers<[1], [0], [0], [1], [0, 0, 1, 1], [], []>} : vector<8x72xbf16>, vector<72x384xbf16>, vector<8x384xf32> -> vector<8x384xf32>
    %31 = vector.broadcast %1 : vector<8x1xf32> to vector<8x384xf32>
    %32 = arith.addf %30, %31 : vector<8x384xf32>
    %cst_43 = arith.constant 0.00392156886 : f32
    %33 = vector.broadcast %cst_43 : f32 to vector<8x384xf32>
    %34 = arith.mulf %32, %33 : vector<8x384xf32>
    %35 = math.tanh %34 : vector<8x384xf32>
    %cst_44 = arith.constant 1.500000e+02 : f32
    %36 = vector.broadcast %cst_44 : f32 to vector<8x384xf32>
    %37 = arith.mulf %35, %36 : vector<8x384xf32>
    %cst_45 = arith.constant 1.275000e+02 : f32
    %38 = vector.broadcast %cst_45 : f32 to vector<8x384xf32>
    %39 = arith.addf %37, %38 : vector<8x384xf32>
    %c0_46 = arith.constant 0 : index
    %c0_47 = arith.constant 0 : index
    %c0_48 = arith.constant 0 : index
    %c0_49 = arith.constant 0 : index
    %40 = vector.load %arg5[%c0_46, %c0_47, %c0_48, %c0_49] : memref<1x1x8x384xf32, #tpu.memory_space<vmem>>, vector<1x1x8x384xf32>
    %41 = vector.shape_cast %40 : vector<1x1x8x384xf32> to vector<8x384xf32>
    %42 = vector.shape_cast %39 : vector<8x384xf32> to vector<1x1x8x384xf32>
    tpu.vector_store %arg5[%c0_46, %c0_47, %c0_48, %c0_49], %42 {strides = array<i32>} : memref<1x1x8x384xf32, #tpu.memory_space<vmem>>, vector<1x1x8x384xf32>,
    return
  }
  func.func @transform_0(%arg0: i32, %arg1: i32) -> (i32, i32, i32, i32) {
    %c0_i32 = arith.constant 0 : i32
    %c0_i32_0 = arith.constant 0 : i32
    %c0_i32_1 = arith.constant 0 : i32
    return %arg0, %arg1, %c0_i32, %c0_i32_0 : i32, i32, i32, i32
  }
  func.func @transform_1(%arg0: i32, %arg1: i32) -> (i32, i32) {
    %c0_i32 = arith.constant 0 : i32
    %c0_i32_0 = arith.constant 0 : i32
    %c0_i32_1 = arith.constant 0 : i32
    return %c0_i32, %c0_i32_0 : i32, i32
  }
  func.func @transform_2(%arg0: i32, %arg1: i32) -> (i32, i32) {
    %c0_i32 = arith.constant 0 : i32
    %c0_i32_0 = arith.constant 0 : i32
    %c0_i32_1 = arith.constant 0 : i32
    return %c0_i32, %c0_i32_0 : i32, i32
  }
  func.func @transform_3(%arg0: i32, %arg1: i32) -> (i32, i32, i32, i32) {
    %c0_i32 = arith.constant 0 : i32
    %c0_i32_0 = arith.constant 0 : i32
    %c0_i32_1 = arith.constant 0 : i32
    return %arg0, %arg1, %c0_i32, %c0_i32_0 : i32, i32, i32, i32
  }
}

</mosaic_0001>

<llo_original>
// kernel: tpu_custom_call.1
$region0: #{tpu_custom_call.1}
  #allocation0 [shape = 'u32[]', space=smem, size = 0x4, offset = 0x4, fixed_abs, tag = 'smem constant byte address 0x4 - core index']
  #allocation1 [shape = 'u32[144,128]{1,0:T(1,128)}', space=vmem, size = 0x12000, scoped, tag = 'internal scratch']
  #allocation2 [shape = 'bf16[72,384]{1,0:T(8,128)(2,1)}', space=vmem, size = 0xd800, scoped, tag = 'scratch operand']
  %s0 = inlined_call_operand.hbm [shape: bf16[2,1,8,512], index: 0, kind: input, shape index: {}]
  %s1 = inlined_call_operand.hbm [shape: bf16[8,72], index: 1, kind: input, shape index: {}]
  %s2 = inlined_call_operand.hbm [shape: f32[8,1], index: 2, kind: input, shape index: {}]
  %s3 = inlined_call_operand.hbm [shape: f32[2,1,8,384], index: 3, kind: output, shape index: {}]
  %s4 = sld [smem:[#allocation0]]
  $region57: #{tpu_custom_call.1} parent=0
    _
  %s6 = ssub.s32 1, %s4
  %s7 = scalar_select 0, %s6, %s4
  $region1: #{tpu_custom_call.1} parent=0
    #allocation3 [shape = 'u8[16384]{0}', space=vmem, size = 0x4000, scoped, tag = 'input window, operand 0']
    #allocation4 [shape = 's32[2]{0}', space=sflag, size = 0x8, scoped, tag = 'scoped memory for tpu_custom_call.1']
    #allocation5 [shape = 's32[2]{0}', space=sflag, size = 0x8, scoped, tag = 'scoped memory for tpu_custom_call.1']
    #allocation6 [shape = 'u8[2048]{0}', space=vmem, size = 0x800, scoped, tag = 'input window, operand 1, single buffered']
    #allocation7 [shape = 's32[1]{0}', space=sflag, size = 0x4, scoped, tag = 'scoped memory for tpu_custom_call.1']
    #allocation8 [shape = 'u8[4096]{0}', space=vmem, size = 0x1000, scoped, tag = 'input window, operand 2, single buffered']
    #allocation9 [shape = 'u8[24576]{0}', space=vmem, size = 0x6000, scoped, tag = 'output window, operand 0']
    %8 = vsyncpa [#allocation4], 0
    %s9 = scalar_lea.sflag [#allocation4], 1
    %10 = vsyncpa %s9, 0
    %11 = vsyncpa [#allocation7], 0
    %12 = vsyncpa [#allocation5], 0
    %s13 = scalar_lea.sflag [#allocation5], 1
    %14 = vsyncpa %s13, 0
    loop: start=0, step=1, limit=4
    $region2: #{tpu_custom_call.1} parent=1 // loop_pre_header
      _
    $region3: #{tpu_custom_call.1} parent=1 // loop_header
      %s16 = sphi 0, %s20
      %p17 = scmp.ge.s32.totalorder %s16, 4
      %s23 = sphi 0, %s35
      %s24 = sphi 0, %s31
      %s25 = sphi 0, %s23
      %s26 = sphi 0, %s24
      %s27 = sphi 0, %s25
      %s28 = sphi 0, %s26
      %s40 = sphi 0, %s42
      %s43 = sphi 0, %s40
      %s44 = sphi 0, %s43
      %s60 = sphi 0, %s44
      %s64 = sphi 0, %s64
      %s66 = sphi 0, %s64
      %s67 = sphi 0, %s66
      %s81 = sphi 0, %s67
      %s85 = sphi 0, %s85
      %s87 = sphi 0, %s85
      %s88 = sphi 0, %s87
      %s102 = sphi 0, %s88
      %s110 = sphi 0, %s112
      %s113 = sphi 0, %s110
      %s114 = sphi 0, %s113
      %s130 = sphi 0, %s114
    $region4: #{tpu_custom_call.1} parent=1 // loop_header_branch
      %19 = sbr.rel (%p17) target = $region8
    $region5: #{tpu_custom_call.1} parent=1 // loop_body
      %s21 = ssub.s32 %s16, 1
      %s22 = ssub.s32 %s16, 2
      %s29 = sadd.s32 1, %s24
      %p30 = scmp.ge.s32.totalorder %s29, 1
      %s31 = scalar_select %p30, 0, %s29
      %s32 = sadd.s32 1, %s23
      %s33 = scalar_select %p30, %s32, %s23
      %p34 = scmp.ge.s32.totalorder %s33, 2
      %s35 = scalar_select %p34, 0, %s33
      %s36 = ssub.s32 %s23, %s35
      %s37 = ssub.s32 %s24, %s31
      %s38 = sor.u32 %s36, %s37
      %p39 = scmp.eq.s32.totalorder %s38, 0
      %s41 = sadd.s32 %s40, 1
      %s42 = scalar_select %p39, %s40, %s41
      %p45 = pneg %p39
      %p46 = scmp.eq.s32.totalorder %s16, 1
      %p47 = por %p45, %p46
      %p48 = scmp.ne.s32.totalorder %s40, %s43
      %p49 = scmp.eq.s32.totalorder %s16, 0
      %p50 = por %p48, %p49
      %p51 = scmp.ne.s32.totalorder %s40, %s43
      %p52 = scmp.eq.s32.totalorder %s21, 1
      %p53 = por %p51, %p52
      %p54 = scmp.ne.s32.totalorder %s43, %s44
      %p55 = scmp.eq.s32.totalorder %s21, 0
      %p56 = por %p54, %p55
      %p57 = scmp.ne.s32.totalorder %s43, %s44
      %p58 = scmp.eq.s32.totalorder %s22, 1
      %p59 = por %p57, %p58
      %p61 = scmp.ne.s32.totalorder %s44, %s60
      %p62 = scmp.eq.s32.totalorder %s22, 0
      %p63 = por %p61, %p62
      %s65 = sadd.s32 %s64, 1
      %p68 = scmp.eq.s32.totalorder %s16, 1
      %p69 = scmp.ne.s32.totalorder %s64, %s66
      %p70 = scmp.eq.s32.totalorder %s16, 0
      %p71 = por %p69, %p70
      %p72 = scmp.ne.s32.totalorder %s64, %s66
      %p73 = scmp.eq.s32.totalorder %s21, 1
      %p74 = por %p72, %p73
      %p75 = scmp.ne.s32.totalorder %s66, %s67
      %p76 = scmp.eq.s32.totalorder %s21, 0
      %p77 = por %p75, %p76
      %p78 = scmp.ne.s32.totalorder %s66, %s67
      %p79 = scmp.eq.s32.totalorder %s22, 1
      %p80 = por %p78, %p79
      %p82 = scmp.ne.s32.totalorder %s67, %s81
      %p83 = scmp.eq.s32.totalorder %s22, 0
      %p84 = por %p82, %p83
      %s86 = sadd.s32 %s85, 1
      %p89 = scmp.eq.s32.totalorder %s16, 1
      %p90 = scmp.ne.s32.totalorder %s85, %s87
      %p91 = scmp.eq.s32.totalorder %s16, 0
      %p92 = por %p90, %p91
      %p93 = scmp.ne.s32.totalorder %s85, %s87
      %p94 = scmp.eq.s32.totalorder %s21, 1
      %p95 = por %p93, %p94
      %p96 = scmp.ne.s32.totalorder %s87, %s88
      %p97 = scmp.eq.s32.totalorder %s21, 0
      %p98 = por %p96, %p97
      %p99 = scmp.ne.s32.totalorder %s87, %s88
      %p100 = scmp.eq.s32.totalorder %s22, 1
      %p101 = por %p99, %p100
      %p103 = scmp.ne.s32.totalorder %s88, %s102
      %p104 = scmp.eq.s32.totalorder %s22, 0
      %p105 = por %p103, %p104
      %s106 = ssub.s32 %s23, %s35
      %s107 = ssub.s32 %s24, %s31
      %s108 = sor.u32 %s106, %s107
      %p109 = scmp.eq.s32.totalorder %s108, 0
      %s111 = sadd.s32 %s110, 1
      %s112 = scalar_select %p109, %s110, %s111
      %p115 = pneg %p109
      %p116 = scmp.eq.s32.totalorder %s16, 1
      %p117 = por %p115, %p116
      %p118 = scmp.ne.s32.totalorder %s110, %s113
      %p119 = scmp.eq.s32.totalorder %s16, 0
      %p120 = por %p118, %p119
      %p121 = scmp.ne.s32.totalorder %s110, %s113
      %p122 = scmp.eq.s32.totalorder %s21, 1
      %p123 = por %p121, %p122
      %p124 = scmp.ne.s32.totalorder %s113, %s114
      %p125 = scmp.eq.s32.totalorder %s21, 0
      %p126 = por %p124, %p125
      %p127 = scmp.ne.s32.totalorder %s113, %s114
      %p128 = scmp.eq.s32.totalorder %s22, 1
      %p129 = por %p127, %p128
      %p131 = scmp.ne.s32.totalorder %s114, %s130
      %p132 = scmp.eq.s32.totalorder %s22, 0
      %p133 = por %p131, %p132
      %p134 = scmp.le.s32.totalorder 1, %s16
      %p135 = scmp.lt.s32.totalorder %s16, 3
      %p136 = pnand %p134, %p135
      %p137 = pneg %p136
      // Predicated region
      $region9: #{tpu_custom_call.1} parent=5 // pred_check
        _
      $region10: #{tpu_custom_call.1} parent=5 // pred_check_branch
        %139 = sbr.rel (%p136) target = $region12
      $region11: #{tpu_custom_call.1} parent=5 // pred_region
        %s140 = ssub.s32 %s16, 1
        // Predicated region
        $region13: #{tpu_custom_call.1} parent=11 // pred_check
          %p141 = pneg %p77
        $region14: #{tpu_custom_call.1} parent=11 // pred_check_branch
          %143 = sbr.rel (%p141) target = $region16
        $region15: #{tpu_custom_call.1} parent=11 // pred_region
          %s145 = ssub.s32 64, 64
          %146 = vsyncadd [#allocation7], %s145
          %s148 = sshll.u32 [#allocation6], 4
          %s149 = int_to_ptr.vmem [resolvable:$true] %s148
          %151 = dma.hbm_to_vmem [thread:$0]  %s1, 64, %s149, [#allocation7]
        $region16: #{tpu_custom_call.1} parent=11 // pred_fallthru
          _
        // Predicated region
        $region17: #{tpu_custom_call.1} parent=11 // pred_check
          %p152 = pneg %p98
        $region18: #{tpu_custom_call.1} parent=11 // pred_check_branch
          %154 = sbr.rel (%p152) target = $region20
        $region19: #{tpu_custom_call.1} parent=11 // pred_region
          %s156 = ssub.s32 128, 128
          %157 = vsyncadd [#allocation7], %s156
          %s159 = sshll.u32 [#allocation8], 4
          %s160 = int_to_ptr.vmem [resolvable:$true] %s159
          %162 = dma.hbm_to_vmem [thread:$0]  %s2, 128, %s160, [#allocation7]
        $region20: #{tpu_custom_call.1} parent=11 // pred_fallthru
          _
      $region12: #{tpu_custom_call.1} parent=5 // pred_fallthru
        _
      %p163 = scmp.lt.s32.totalorder %s16, 2
      // Predicated region
      $region21: #{tpu_custom_call.1} parent=5 // pred_check
        %p164 = pneg %p163
      $region22: #{tpu_custom_call.1} parent=5 // pred_check_branch
        %166 = sbr.rel (%p164) target = $region24
      $region23: #{tpu_custom_call.1} parent=5 // pred_region
        // Predicated region
        $region25: #{tpu_custom_call.1} parent=23 // pred_check
          %p167 = pneg %p50
        $region26: #{tpu_custom_call.1} parent=23 // pred_check_branch
          %169 = sbr.rel (%p167) target = $region28
        $region27: #{tpu_custom_call.1} parent=23 // pred_region
          %s170 = sand.u32 %s40, 1
          %s171 = scalar_lea.sflag [#allocation4], %s170
          %s172 = sand.u32 %s40, 1
          %s173 = smul.addr %s172, 16
          %s174 = scalar_lea.vmem [#allocation3], %s173
          %s176 = ssub.s32 256, 256
          %177 = vsyncadd %s171, %s176
          %s178 = smul.addr %s24, 4
          %s179 = smul.addr %s23, 4
          %s180 = sadd.s32 %s178, %s179
          %s181 = smul.addr %s180, 64
          %s182 = scalar_lea.hbm %s0, %s181
          %s184 = sshll.u32 %s174, 4
          %s185 = int_to_ptr.vmem [resolvable:$true] %s184
          %187 = dma.hbm_to_vmem [thread:$0]  %s182, 256, %s185, %s171
        $region28: #{tpu_custom_call.1} parent=23 // pred_fallthru
          _
      $region24: #{tpu_custom_call.1} parent=5 // pred_fallthru
        _
      %p188 = scmp.le.s32.totalorder 1, %s16
      %p189 = scmp.lt.s32.totalorder %s16, 3
      %p190 = pnand %p188, %p189
      %p191 = pneg %p190
      // Predicated region
      $region29: #{tpu_custom_call.1} parent=5 // pred_check
        _
      $region30: #{tpu_custom_call.1} parent=5 // pred_check_branch
        %193 = sbr.rel (%p190) target = $region32
      $region31: #{tpu_custom_call.1} parent=5 // pred_region
        %s194 = ssub.s32 %s16, 1
        %s195 = sand.u32 %s43, 1
        %s196 = scalar_lea.sflag [#allocation4], %s195
        %s197 = sand.u32 %s43, 1
        %s198 = smul.addr %s197, 16
        %s199 = scalar_lea.vmem [#allocation3], %s198
        // Predicated region
        $region33: #{tpu_custom_call.1} parent=31 // pred_check
          %p200 = pneg %p56
        $region34: #{tpu_custom_call.1} parent=31 // pred_check_branch
          %202 = sbr.rel (%p200) target = $region36
        $region35: #{tpu_custom_call.1} parent=31 // pred_region
          %203 = dma.done %s196, 256
        $region36: #{tpu_custom_call.1} parent=31 // pred_fallthru
          _
        // Predicated region
        $region37: #{tpu_custom_call.1} parent=31 // pred_check
          %p204 = pneg %p77
        $region38: #{tpu_custom_call.1} parent=31 // pred_check_branch
          %206 = sbr.rel (%p204) target = $region40
        $region39: #{tpu_custom_call.1} parent=31 // pred_region
          %207 = dma.done [#allocation7], 64
        $region40: #{tpu_custom_call.1} parent=31 // pred_fallthru
          _
        // Predicated region
        $region41: #{tpu_custom_call.1} parent=31 // pred_check
          %p208 = pneg %p98
        $region42: #{tpu_custom_call.1} parent=31 // pred_check_branch
          %210 = sbr.rel (%p208) target = $region44
        $region43: #{tpu_custom_call.1} parent=31 // pred_region
          %211 = dma.done [#allocation7], 128
        $region44: #{tpu_custom_call.1} parent=31 // pred_fallthru
          _
        %s212 = sand.u32 %s43, 1
        %s213 = scalar_lea.sflag [#allocation4], %s212
        %s214 = sand.u32 %s43, 1
        %s215 = smul.addr %s214, 16
        %s216 = scalar_lea.vmem [#allocation3], %s215
        %p217 = pneg %p56
        %p218 = pneg %p53
        %p219 = pneg %p77
        %p220 = pneg %p74
        %p221 = pneg %p98
        %p222 = pneg %p95
        %p223 = pneg %p126
        %p224 = pneg %p123
        %s225 = sand.u32 %s113, 1
        %s226 = scalar_lea.sflag [#allocation5], %s225
        %s227 = sand.u32 %s113, 1
        %s228 = smul.addr %s227, 24
        %s229 = scalar_lea.vmem [#allocation9], %s228
        %v231 = vld [vmem:[#allocation6] sm:$0xf]
        %v232 = vld [vmem:[#allocation8] sm:$0xff]
        %v233 = vld [vmem:[%s199] sm:$0xff]
        %v234 = vld [vmem:[%s199 + $0x8] sm:$0xf]
        %235 = vst [vmem:[#allocation2] sm:$0xff] %v233
        %236 = vst [vmem:[#allocation2 + $0x8] sm:$0xf] %v234
        %v237 = vld [vmem:[%s199] sm:$0xff]
        %v238 = vld [vmem:[%s199 + $0x8] sm:$0xff]
        %241 = vrot.lane.b32.xlu0 %v237, 127
        %v242 = vpop.permute.xlu0 %241
        %243 = vrot.lane.b32.xlu0 %v238, 127
        %v244 = vpop.permute.xlu0 %243
        %v245 = vrot.slane %v242, 4
        %v246 = vrot.slane %v244, 4
        %vm247 = vcmask 1043456
        %v248 = vsel %vm247, %v245, %v246
        %vm249 = vcmask 1039360
        %v250 = vsel %vm249, %v242, %v248
        %v251 = vsel %vm249, %v244, %v246
        %254 = vst [vmem:[#allocation2 + $0xc] sm:$0xff] %v250
        %255 = vst [vmem:[#allocation2 + $0x14] sm:$0xf] %v251
        %v256 = vld [vmem:[%s199] sm:$0xff]
        %v257 = vld [vmem:[%s199 + $0x8] sm:$0xff]
        %260 = vrot.lane.b32.xlu0 %v256, 126
        %v261 = vpop.permute.xlu0 %260
        %262 = vrot.lane.b32.xlu0 %v257, 126
        %v263 = vpop.permute.xlu0 %262
        %v264 = vrot.slane %v261, 4
        %v265 = vrot.slane %v263, 4
        %v266 = vsel %vm247, %v264, %v265
        %vm267 = vcmask 1031168
        %v268 = vsel %vm267, %v261, %v266
        %v269 = vsel %vm267, %v263, %v265
        %272 = vst [vmem:[#allocation2 + $0x18] sm:$0xff] %v268
        %273 = vst [vmem:[#allocation2 + $0x20] sm:$0xf] %v269
        %v274 = vld [vmem:[%s199] sm:$0xff]
        %v275 = vld [vmem:[%s199 + $0x8] sm:$0xff]
        %278 = vrot.lane.b32.xlu0 %v274, 110
        %v279 = vpop.permute.xlu0 %278
        %280 = vrot.lane.b32.xlu0 %v275, 110
        %v281 = vpop.permute.xlu0 %280
        %v282 = vrot.slane %v279, 4
        %v283 = vrot.slane %v281, 4
        %v284 = vsel %vm247, %v282, %v283
        %vm285 = vcmask 900096
        %v286 = vsel %vm285, %v279, %v284
        %v287 = vsel %vm285, %v281, %v283
        %290 = vst [vmem:[#allocation2 + $0x24] sm:$0xff] %v286
        %291 = vst [vmem:[#allocation2 + $0x2c] sm:$0xf] %v287
        %v292 = vld [vmem:[%s199] sm:$0xff]
        %v293 = vld [vmem:[%s199 + $0x8] sm:$0xff]
        %296 = vrot.lane.b32.xlu0 %v292, 109
        %v297 = vpop.permute.xlu0 %296
        %298 = vrot.lane.b32.xlu0 %v293, 109
        %v299 = vpop.permute.xlu0 %298
        %v300 = vrot.slane %v297, 4
        %v301 = vrot.slane %v299, 4
        %v302 = vsel %vm247, %v300, %v301
        %vm303 = vcmask 891904
        %v304 = vsel %vm303, %v297, %v302
        %v305 = vsel %vm303, %v299, %v301
        %308 = vst [vmem:[#allocation2 + $0x30] sm:$0xff] %v304
        %309 = vst [vmem:[#allocation2 + $0x38] sm:$0xf] %v305
        %v310 = vld [vmem:[%s199] sm:$0xff]
        %v311 = vld [vmem:[%s199 + $0x8] sm:$0xff]
        %314 = vrot.lane.b32.xlu0 %v310, 108
        %v315 = vpop.permute.xlu0 %314
        %316 = vrot.lane.b32.xlu0 %v311, 108
        %v317 = vpop.permute.xlu0 %316
        %v318 = vrot.slane %v315, 4
        %v319 = vrot.slane %v317, 4
        %v320 = vsel %vm247, %v318, %v319
        %vm321 = vcmask 883712
        %v322 = vsel %vm321, %v315, %v320
        %v323 = vsel %vm321, %v317, %v319
        %326 = vst [vmem:[#allocation2 + $0x3c] sm:$0xff] %v322
        %327 = vst [vmem:[#allocation2 + $0x44] sm:$0xf] %v323
        %v328 = vld [vmem:[%s199] sm:$0xff]
        %v329 = vld [vmem:[%s199 + $0x8] sm:$0xff]
        %332 = vrot.lane.b32.xlu0 %v328, 92
        %v333 = vpop.permute.xlu0 %332
        %334 = vrot.lane.b32.xlu0 %v329, 92
        %v335 = vpop.permute.xlu0 %334
        %v336 = vrot.slane %v333, 4
        %v337 = vrot.slane %v335, 4
        %v338 = vsel %vm247, %v336, %v337
        %vm339 = vcmask 752640
        %v340 = vsel %vm339, %v333, %v338
        %v341 = vsel %vm339, %v335, %v337
        %344 = vst [vmem:[#allocation2 + $0x48] sm:$0xff] %v340
        %345 = vst [vmem:[#allocation2 + $0x50] sm:$0xf] %v341
        %v346 = vld [vmem:[%s199] sm:$0xff]
        %v347 = vld [vmem:[%s199 + $0x8] sm:$0xff]
        %350 = vrot.lane.b32.xlu0 %v346, 91
        %v351 = vpop.permute.xlu0 %350
        %352 = vrot.lane.b32.xlu0 %v347, 91
        %v353 = vpop.permute.xlu0 %352
        %v354 = vrot.slane %v351, 4
        %v355 = vrot.slane %v353, 4
        %v356 = vsel %vm247, %v354, %v355
        %vm357 = vcmask 744448
        %v358 = vsel %vm357, %v351, %v356
        %v359 = vsel %vm357, %v353, %v355
        %362 = vst [vmem:[#allocation2 + $0x54] sm:$0xff] %v358
        %363 = vst [vmem:[#allocation2 + $0x5c] sm:$0xf] %v359
        %v364 = vld [vmem:[%s199] sm:$0xff]
        %v365 = vld [vmem:[%s199 + $0x8] sm:$0xff]
        %368 = vrot.lane.b32.xlu0 %v364, 90
        %v369 = vpop.permute.xlu0 %368
        %370 = vrot.lane.b32.xlu0 %v365, 90
        %v371 = vpop.permute.xlu0 %370
        %v372 = vrot.slane %v369, 4
        %v373 = vrot.slane %v371, 4
        %v374 = vsel %vm247, %v372, %v373
        %vm375 = vcmask 736256
        %v376 = vsel %vm375, %v369, %v374
        %v377 = vsel %vm375, %v371, %v373
        %380 = vst [vmem:[#allocation2 + $0x60] sm:$0xff] %v376
        %381 = vst [vmem:[#allocation2 + $0x68] sm:$0xf] %v377
        %v382 = vld [vmem:[#allocation2] sm:$0xff]
        %v383 = vld [vmem:[#allocation2 + $0x8] sm:$0xf]
        %v384 = vld [vmem:[#allocation2 + $0xc] sm:$0xff]
        %v385 = vld [vmem:[#allocation2 + $0x14] sm:$0xf]
        %v386 = vld [vmem:[#allocation2 + $0x18] sm:$0xff]
        %v387 = vld [vmem:[#allocation2 + $0x20] sm:$0xf]
        %v388 = vld [vmem:[#allocation2 + $0x24] sm:$0xff]
        %v389 = vld [vmem:[#allocation2 + $0x2c] sm:$0xf]
        %v390 = vld [vmem:[#allocation2 + $0x30] sm:$0xff]
        %v391 = vld [vmem:[#allocation2 + $0x38] sm:$0xf]
        %v392 = vld [vmem:[#allocation2 + $0x3c] sm:$0xff]
        %v393 = vld [vmem:[#allocation2 + $0x44] sm:$0xf]
        %v394 = vld [vmem:[#allocation2 + $0x48] sm:$0xff]
        %v395 = vld [vmem:[#allocation2 + $0x50] sm:$0xf]
        %v396 = vld [vmem:[#allocation2 + $0x54] sm:$0xff]
        %v397 = vld [vmem:[#allocation2 + $0x5c] sm:$0xf]
        %v398 = vld [vmem:[#allocation2 + $0x60] sm:$0xff]
        %v399 = vld [vmem:[#allocation2 + $0x68] sm:$0xf]
        %401 = vset.pattern.permute.xlu0 0
        %402 = vperm.xlu0 %401, %v232
        %v403 = vpop.permute.xlu0 %402
        %v423 = vunpack.c.l.b16 %v382
        %v424 = vunpack.c.h.b16 %v382
        %v425 = vunpack.c.l.b16 %v383
        %v426 = vunpack.c.l.b16 %v384
        %v427 = vunpack.c.h.b16 %v384
        %v428 = vunpack.c.l.b16 %v385
        %v429 = vunpack.c.l.b16 %v386
        %v430 = vunpack.c.h.b16 %v386
        %v431 = vunpack.c.l.b16 %v387
        %v432 = vunpack.c.l.b16 %v388
        %v433 = vunpack.c.h.b16 %v388
        %v434 = vunpack.c.l.b16 %v389
        %v435 = vunpack.c.l.b16 %v390
        %v436 = vunpack.c.h.b16 %v390
        %v437 = vunpack.c.l.b16 %v391
        %v438 = vunpack.c.l.b16 %v392
        %v439 = vunpack.c.h.b16 %v392
        %v440 = vunpack.c.l.b16 %v393
        %v441 = vunpack.c.l.b16 %v394
        %v442 = vunpack.c.h.b16 %v394
        %v443 = vunpack.c.l.b16 %v395
        %v444 = vunpack.c.l.b16 %v396
        %v445 = vunpack.c.h.b16 %v396
        %v446 = vunpack.c.l.b16 %v397
        %v447 = vunpack.c.l.b16 %v398
        %v448 = vunpack.c.h.b16 %v398
        %v449 = vunpack.c.l.b16 %v399
        %v450 = vpack.c.b16 %v426, %v423
        %v451 = vpack.c.b16 %v427, %v424
        %v452 = vpack.c.b16 %v428, %v425
        %v453 = vpack.c.b16 %v432, %v429
        %v454 = vpack.c.b16 %v433, %v430
        %v455 = vpack.c.b16 %v434, %v431
        %v456 = vpack.c.b16 %v438, %v435
        %v457 = vpack.c.b16 %v439, %v436
        %v458 = vpack.c.b16 %v440, %v437
        %v459 = vpack.c.b16 %v444, %v441
        %v460 = vpack.c.b16 %v445, %v442
        %v461 = vpack.c.b16 %v446, %v443
        %v462 = vpack.c.b16 %v447, %v447
        %v463 = vpack.c.b16 %v448, %v448
        %v464 = vpack.c.b16 %v449, %v449
        %vm477 = vcmask 588800
        %v479 = vsel %vm477, %v231, 0
        %vm481 = vcmask 1043456
        %v483 = vsel %vm481, %v462, 0
        %v486 = vsel %vm481, %v463, 0
        %v489 = vsel %vm481, %v464, 0
        %491 = vmatprep.subr.bf16.mxu0 %v451
        %492 = vmatpush1.bf16.msra.mxu0 %v450
        %493 = vmatprep.subr.bf16.mxu0 %v454
        %494 = vmatpush1.bf16.msra.mxu0 %v453
        %495 = vmatprep.subr.bf16.mxu0 %v457
        %496 = vmatpush1.bf16.msra.mxu0 %v456
        %497 = vmatprep.subr.bf16.mxu0 %v460
        %498 = vmatpush1.bf16.msra.mxu0 %v459
        %499 = vmatprep.subr.bf16.mxu0 %v486
        %500 = vmatpush1.bf16.msra.mxu0 %v483
        %501 = vmatprep.subr.bf16.mxu0 0
        %502 = vmatpush1.bf16.msra.mxu0 0
        %503 = vmatprep.subr.bf16.mxu0 0
        %504 = vmatpush1.bf16.msra.mxu0 0
        %505 = vmatprep.subr.bf16.mxu0 0
        %506 = vmatpush1.bf16.msra.mxu0 0
        %507 = vmatprep.subr.bf16.mxu0 0
        %508 = vmatpush1.bf16.msra.mxu0 0
        %509 = vmatprep.subr.bf16.mxu0 0
        %510 = vmatpush1.bf16.msra.mxu0 0
        %511 = vmatprep.subr.bf16.mxu0 0
        %512 = vmatpush1.bf16.msra.mxu0 0
        %513 = vmatprep.subr.bf16.mxu0 0
        %514 = vmatpush1.bf16.msra.mxu0 0
        %515 = vmatprep.subr.bf16.mxu0 0
        %516 = vmatpush1.bf16.msra.mxu0 0
        %517 = vmatprep.subr.bf16.mxu0 0
        %518 = vmatpush1.bf16.msra.mxu0 0
        %519 = vmatprep.subr.bf16.mxu0 0
        %520 = vmatpush1.bf16.msra.mxu0 0
        %521 = vmatprep.subr.bf16.mxu0 0
        %522 = vmatpush1.bf16.msra.mxu0 0
        %523 = vmatprep.mubr.bf16.mxu0 0
        %524 = vmatmul.mubr.bf16.gmra.mrb[0].mxu0 %v479
        %v525 = vpop.f32.mrb[0].mxu0
        %v526 = vadd.f32 %v403, %v525
        %v527 = vpop.f32.mrb[0].mxu0
        %v528 = vadd.f32 %v403, %v527
        %v529 = vpop.f32.mrb[0].mxu0
        %v530 = vpop.f32.mrb[0].mxu0
        %531 = vdwg.mxu0
        %532 = vmatprep.subr.bf16.mxu0 0
        %533 = vmatpush1.bf16.msra.mxu0 %v452
        %534 = vmatprep.subr.bf16.mxu0 0
        %535 = vmatpush1.bf16.msra.mxu0 %v455
        %536 = vmatprep.subr.bf16.mxu0 0
        %537 = vmatpush1.bf16.msra.mxu0 %v458
        %538 = vmatprep.subr.bf16.mxu0 0
        %539 = vmatpush1.bf16.msra.mxu0 %v461
        %540 = vmatprep.subr.bf16.mxu0 0
        %541 = vmatpush1.bf16.msra.mxu0 %v489
        %542 = vmatprep.subr.bf16.mxu0 0
        %543 = vmatpush1.bf16.msra.mxu0 0
        %544 = vmatprep.subr.bf16.mxu0 0
        %545 = vmatpush1.bf16.msra.mxu0 0
        %546 = vmatprep.subr.bf16.mxu0 0
        %547 = vmatpush1.bf16.msra.mxu0 0
        %548 = vmatprep.subr.bf16.mxu0 0
        %549 = vmatpush1.bf16.msra.mxu0 0
        %550 = vmatprep.subr.bf16.mxu0 0
        %551 = vmatpush1.bf16.msra.mxu0 0
        %552 = vmatprep.subr.bf16.mxu0 0
        %553 = vmatpush1.bf16.msra.mxu0 0
        %554 = vmatprep.subr.bf16.mxu0 0
        %555 = vmatpush1.bf16.msra.mxu0 0
        %556 = vmatprep.subr.bf16.mxu0 0
        %557 = vmatpush1.bf16.msra.mxu0 0
        %558 = vmatprep.subr.bf16.mxu0 0
        %559 = vmatpush1.bf16.msra.mxu0 0
        %560 = vmatprep.subr.bf16.mxu0 0
        %561 = vmatpush1.bf16.msra.mxu0 0
        %562 = vmatprep.subr.bf16.mxu0 0
        %563 = vmatpush1.bf16.msra.mxu0 0
        %564 = vmatprep.mubr.bf16.mxu0 0
        %565 = vmatmul.mubr.bf16.gmra.mrb[0].mxu0 %v479
        %v566 = vpop.f32.mrb[0].mxu0
        %v567 = vadd.f32 %v403, %v566
        %v568 = vpop.f32.mrb[0].mxu0
        %v569 = vpop.f32.mrb[0].mxu0
        %v570 = vpop.f32.mrb[0].mxu0
        %571 = vdwg.mxu0
        %v572 = vmul.f32 %v526, 0.003921569
        %v573 = vmul.f32 %v528, 0.003921569
        %v574 = vmul.f32 %v567, 0.003921569
        %v575 = vtanh.pop %v572
        %v576 = vtanh.pop %v573
        %v577 = vtanh.pop %v574
        %v578 = vmul.f32 %v575, 150.0
        %v579 = vmul.f32 %v576, 150.0
        %v580 = vmul.f32 %v577, 150.0
        %v581 = vadd.f32 %v578, 127.5
        %v582 = vadd.f32 %v579, 127.5
        %v583 = vadd.f32 %v580, 127.5
        %584 = vst [vmem:[%s229] sm:$0xff] %v581
        %585 = vst [vmem:[%s229 + $0x8] sm:$0xff] %v582
        %586 = vst [vmem:[%s229 + $0x10] sm:$0xff] %v583
        %s587 = sand.u32 %s113, 1
        %s588 = scalar_lea.sflag [#allocation5], %s587
        %s589 = sand.u32 %s113, 1
        %s590 = smul.addr %s589, 24
        %s591 = scalar_lea.vmem [#allocation9], %s590
        // Predicated region
        $region45: #{tpu_custom_call.1} parent=31 // pred_check
          %p592 = pneg %p123
        $region46: #{tpu_custom_call.1} parent=31 // pred_check_branch
          %594 = sbr.rel (%p592) target = $region48
        $region47: #{tpu_custom_call.1} parent=31 // pred_region
          %s596 = ssub.s32 384, 384
          %597 = vsyncadd %s588, %s596
          %s598 = smul.addr %s26, 3
          %s599 = smul.addr %s25, 3
          %s600 = sadd.s32 %s598, %s599
          %s601 = smul.addr %s600, 128
          %s602 = scalar_lea.hbm %s3, %s601
          %s604 = sshll.u32 %s591, 4
          %s605 = int_to_ptr.vmem [resolvable:$true] %s604
          %607 = dma.vmem_to_hbm [thread:$0]  %s605, 384, %s602, %s588
        $region48: #{tpu_custom_call.1} parent=31 // pred_fallthru
          _
      $region32: #{tpu_custom_call.1} parent=5 // pred_fallthru
        _
      %p608 = scmp.le.s32.totalorder 2, %s16
      // Predicated region
      $region49: #{tpu_custom_call.1} parent=5 // pred_check
        %p609 = pneg %p608
      $region50: #{tpu_custom_call.1} parent=5 // pred_check_branch
        %611 = sbr.rel (%p609) target = $region52
      $region51: #{tpu_custom_call.1} parent=5 // pred_region
        %s612 = ssub.s32 %s16, 2
        // Predicated region
        $region53: #{tpu_custom_call.1} parent=51 // pred_check
          %p613 = pneg %p129
        $region54: #{tpu_custom_call.1} parent=51 // pred_check_branch
          %615 = sbr.rel (%p613) target = $region56
        $region55: #{tpu_custom_call.1} parent=51 // pred_region
          %s616 = sand.u32 %s114, 1
          %s617 = scalar_lea.sflag [#allocation5], %s616
          %s618 = sand.u32 %s114, 1
          %s619 = smul.addr %s618, 24
          %s620 = scalar_lea.vmem [#allocation9], %s619
          %621 = dma.done %s617, 384
        $region56: #{tpu_custom_call.1} parent=51 // pred_fallthru
          _
      $region52: #{tpu_custom_call.1} parent=5 // pred_fallthru
        _
    $region6: #{tpu_custom_call.1} parent=1 // loop_footer
      %s20 = sadd.s32 1, %s16
    $region7: #{tpu_custom_call.1} parent=1 // loop_footer_branch
      %15 = sbr.rel target = $region3
    $region8: #{tpu_custom_call.1} parent=1 // loop_exit
      _
    %622 = vsyncpa [#allocation4], 1
    %s623 = scalar_lea.sflag [#allocation4], 1
    %624 = vsyncpa %s623, 1
    %625 = vsyncpa [#allocation7], 1
    %626 = vsyncpa [#allocation5], 1
    %s627 = scalar_lea.sflag [#allocation5], 1
    %628 = vsyncpa %s627, 1

</llo_original>
